<compile_context>
chip_gen: v5e
topology: v5e:2x2
jax: 0.10.0
libtpu: 0.0.40
codegen_flags: <defaults>
</compile_context>

<pallas_src>
import functools

import jax
import jax.numpy as jnp
from jax.experimental import pallas as pl
from jax.experimental.pallas import tpu as pltpu


def timestep_block_kernel(x_ref, w1_ref, b1_ref, w2_ref, b2_ref, o_ref, acc_ref):
    k = pl.program_id(1)

    @pl.when(k == 0)
    def _():
        acc_ref[...] = jnp.zeros_like(acc_ref)

    # Hidden chunk for this K step: h_k = SiLU(x @ w1[:, blk_k] + b1[blk_k]).
    # f32 math for bias + SiLU; cast to bf16 only to feed the second MXU pass.
    t = jnp.dot(x_ref[...], w1_ref[...], preferred_element_type=jnp.float32)
    t = t + b1_ref[...]
    h = (t * jax.nn.sigmoid(t)).astype(w2_ref.dtype)

    # Accumulate this chunk's contribution to the output strip (f32 accumulator).
    acc_ref[...] += jnp.dot(h, w2_ref[...], preferred_element_type=jnp.float32)

    @pl.when(k == pl.num_programs(1) - 1)
    def _():
        o_ref[...] = (acc_ref[...] + b2_ref[...]).astype(o_ref.dtype)


def _pick_tile(total, target):
    """Largest multiple of 128 that divides `total` and is <= target."""
    t = max(128, (min(target, total) // 128) * 128)
    while total % t != 0:
        t -= 128
    return t


def timestep_block(x, w1, b1, w2, b2, *, tk=512, tn=None,
                   compute_dtype=jnp.bfloat16):
    """x: (B, E); w1: (E, 4E); b1: (4E,); w2: (4E, 4E); b2: (4E,)."""
    B, E = x.shape
    H = w1.shape[1]
    assert w1.shape == (E, H) and w2.shape == (H, H)
    assert b1.shape == (H,) and b2.shape == (H,)
    assert H % 128 == 0, "hidden width must be a multiple of 128 (lane dim)"

    tk = _pick_tile(H, tk)
    tn = H if tn is None else _pick_tile(H, tn)
    n_n, n_k = H // tn, H // tk

    out_dtype = x.dtype
    xc = x.astype(compute_dtype)
    w1c = w1.astype(compute_dtype)
    w2c = w2.astype(compute_dtype)
    b1_2d = b1.astype(jnp.float32).reshape(1, H)
    b2_2d = b2.astype(jnp.float32).reshape(1, H)

    # Rough VMEM budget: resident x + double-buffered w1/b1/w2/b2/out + acc.
    cb = jnp.dtype(compute_dtype).itemsize
    ob = jnp.dtype(out_dtype).itemsize
    est = (B * E * cb
           + 2 * (E * tk * cb + tk * 4 + tk * tn * cb + tn * 4 + B * tn * ob)
           + B * tn * 4)
    cp_kwargs = dict(dimension_semantics=("parallel", "arbitrary"))
    if est > 12 * 1024 * 1024:
        # Only raise the scoped limit when large shapes actually need it.
        cp_kwargs["vmem_limit_bytes"] = int(min(96 * 1024 * 1024,
                                                2 * est + (4 << 20)))

    return pl.pallas_call(
        timestep_block_kernel,
        out_shape=jax.ShapeDtypeStruct((B, H), out_dtype),
        grid_spec=pltpu.PrefetchScalarGridSpec(
            num_scalar_prefetch=0,
            grid=(n_n, n_k),                                   # reduction axis last
            in_specs=[
                pl.BlockSpec((B, E), lambda n, k: (0, 0)),     # x  (VMEM resident)
                pl.BlockSpec((E, tk), lambda n, k: (0, k)),    # w1 (streamed per K)
                pl.BlockSpec((1, tk), lambda n, k: (0, k)),    # b1
                pl.BlockSpec((tk, tn), lambda n, k: (k, n)),   # w2 (streamed per K)
                pl.BlockSpec((1, tn), lambda n, k: (0, n)),    # b2
            ],
            out_specs=pl.BlockSpec((B, tn), lambda n, k: (0, n)),
            scratch_shapes=[
                pltpu.VMEM((B, tn), jnp.float32),              # f32 accumulator
            ],
        ),
        compiler_params=pltpu.CompilerParams(**cp_kwargs),
    )(xc, w1c, b1_2d, w2c, b2_2d)


def init_params(key, num_embeddings, dtype=jnp.float32):
    """Deterministic init mimicking nn.Linear's uniform(-1/sqrt(fan_in), ...)."""
    E = num_embeddings
    H = 4 * E
    k1, k2, k3, k4 = jax.random.split(key, 4)
    lim1 = 1.0 / (E ** 0.5)
    lim2 = 1.0 / (H ** 0.5)
    w1 = jax.random.uniform(k1, (E, H), dtype, minval=-lim1, maxval=lim1)
    b1 = jax.random.uniform(k2, (H,), dtype, minval=-lim1, maxval=lim1)
    w2 = jax.random.uniform(k3, (H, H), dtype, minval=-lim2, maxval=lim2)
    b2 = jax.random.uniform(k4, (H,), dtype, minval=-lim2, maxval=lim2)
    return w1, b1, w2, b2


def reference_quantized(x, w1, b1, w2, b2, compute_dtype=jnp.bfloat16):
    """Pure-JAX reference matching the kernel's bf16-weight / f32-accum path."""
    f32 = jnp.float32
    xc = x.astype(compute_dtype).astype(f32)
    w1c = w1.astype(compute_dtype).astype(f32)
    w2c = w2.astype(compute_dtype).astype(f32)
    h = jnp.dot(xc, w1c, preferred_element_type=f32) + b1.astype(f32)
    h = h * jax.nn.sigmoid(h)
    h = h.astype(compute_dtype).astype(f32)
    out = jnp.dot(h, w2c, preferred_element_type=f32) + b2.astype(f32)
    return out.astype(x.dtype)


if __name__ == "__main__":
    key = jax.random.PRNGKey(0)
    kx, kp = jax.random.split(key)

    # Small demo shape consistent with the module: B=8, E=32 -> hidden H=128.
    # (At this size the grid collapses to (1, 1); the K/N streaming only kicks
    #  in for realistic E where H spans multiple 128-wide tiles.)
    batch = 8
    num_embeddings = 32

    x = jax.random.normal(kx, (batch, num_embeddings), dtype=jnp.float32)
    w1, b1, w2, b2 = init_params(kp, num_embeddings)

    fn = jax.jit(functools.partial(timestep_block))
    out = jax.block_until_ready(fn(x, w1, b1, w2, b2))

    ref = reference_quantized(x, w1, b1, w2, b2)
    assert out.shape == (batch, 4 * num_embeddings)
    assert out.dtype == x.dtype
    assert jnp.allclose(out.astype(jnp.float32), ref.astype(jnp.float32),
                        atol=2e-3, rtol=2e-3)

    print("KERNEL_OK")
</pallas_src>

<mosaic_0001>
module attributes {stable_mosaic.version = 11 : i64} {
  func.func @timestep_block_kernel(%arg0: i32, %arg1: i32, %arg2: memref<8x32xbf16, #tpu.memory_space<vmem>>, %arg3: memref<32x128xbf16, #tpu.memory_space<vmem>>, %arg4: memref<1x128xf32, #tpu.memory_space<vmem>>, %arg5: memref<128x128xbf16, #tpu.memory_space<vmem>>, %arg6: memref<1x128xf32, #tpu.memory_space<vmem>>, %arg7: memref<8x128xf32, #tpu.memory_space<vmem>>, %arg8: memref<8x128xf32, #tpu.memory_space<vmem>>) attributes {dimension_semantics = [#tpu.dimension_semantics<parallel>, #tpu.dimension_semantics<arbitrary>], iteration_bounds = array<i64: 1, 1>, scalar_prefetch = 0 : i64, scratch_operands = 1 : i64, tpu.core_type = #tpu.core_type<tc>, window_params = [{pipeline_mode = #tpu.pipeline_mode<synchronous>, transform_indices = @transform_0, window_bounds = array<i64: 8, 32>}, {transform_indices = @transform_1, window_bounds = array<i64: 32, 128>}, {transform_indices = @transform_2, window_bounds = array<i64: 1, 128>}, {transform_indices = @transform_3, window_bounds = array<i64: 128, 128>}, {transform_indices = @transform_4, window_bounds = array<i64: 1, 128>}, {transform_indices = @transform_5, window_bounds = array<i64: 8, 128>}]} {
    %c0_i32 = arith.constant 0 : i32
    %0 = arith.cmpi eq, %arg1, %c0_i32 : i32
    %1 = arith.extui %0 : i1 to i32
    %c0_i32_0 = arith.constant 0 : i32
    %2 = arith.cmpi ne, %1, %c0_i32_0 : i32
    scf.if %2 {
      %cst_16 = arith.constant 0.000000e+00 : f32
      %24 = vector.broadcast %cst_16 : f32 to vector<8x128xf32>
      %c0_17 = arith.constant 0 : index
      %c0_18 = arith.constant 0 : index
      %25 = vector.load %arg8[%c0_17, %c0_18] : memref<8x128xf32, #tpu.memory_space<vmem>>, vector<8x128xf32>
      tpu.vector_store %arg8[%c0_17, %c0_18], %24 {strides = array<i32>} : memref<8x128xf32, #tpu.memory_space<vmem>>, vector<8x128xf32>,
    } else {
    }
    %c0 = arith.constant 0 : index
    %c0_1 = arith.constant 0 : index
    %3 = vector.load %arg2[%c0, %c0_1] : memref<8x32xbf16, #tpu.memory_space<vmem>>, vector<8x32xbf16>
    %c0_2 = arith.constant 0 : index
    %c0_3 = arith.constant 0 : index
    %4 = vector.load %arg3[%c0_2, %c0_3] : memref<32x128xbf16, #tpu.memory_space<vmem>>, vector<32x128xbf16>
    %cst = arith.constant dense<0.000000e+00> : vector<8x128xf32>
    %5 = tpu.matmul %3, %4, %cst {dimension_numbers = #tpu.dot_dimension_numbers<[1], [0], [0], [1], [0, 0, 1, 1], [], []>} : vector<8x32xbf16>, vector<32x128xbf16>, vector<8x128xf32> -> vector<8x128xf32>
    %c0_4 = arith.constant 0 : index
    %c0_5 = arith.constant 0 : index
    %6 = vector.load %arg4[%c0_4, %c0_5] : memref<1x128xf32, #tpu.memory_space<vmem>>, vector<1x128xf32>
    %7 = vector.broadcast %6 : vector<1x128xf32> to vector<8x128xf32>
    %8 = arith.addf %5, %7 : vector<8x128xf32>
    %9 = arith.negf %8 : vector<8x128xf32>
    %10 = math.exp %9 : vector<8x128xf32>
    %cst_6 = arith.constant 1.000000e+00 : f32
    %11 = vector.broadcast %cst_6 : f32 to vector<8x128xf32>
    %12 = arith.addf %11, %10 : vector<8x128xf32>
    %13 = arith.divf %11, %12 : vector<8x128xf32>
    %14 = arith.mulf %8, %13 : vector<8x128xf32>
    %15 = arith.truncf %14 : vector<8x128xf32> to vector<8x128xbf16>
    %c0_7 = arith.constant 0 : index
    %c0_8 = arith.constant 0 : index
    %16 = vector.load %arg8[%c0_7, %c0_8] : memref<8x128xf32, #tpu.memory_space<vmem>>, vector<8x128xf32>
    %c0_9 = arith.constant 0 : index
    %c0_10 = arith.constant 0 : index
    %17 = vector.load %arg5[%c0_9, %c0_10] : memref<128x128xbf16, #tpu.memory_space<vmem>>, vector<128x128xbf16>
    %cst_11 = arith.constant dense<0.000000e+00> : vector<8x128xf32>
    %18 = tpu.matmul %15, %17, %cst_11 {dimension_numbers = #tpu.dot_dimension_numbers<[1], [0], [0], [1], [0, 0, 1, 1], [], []>} : vector<8x128xbf16>, vector<128x128xbf16>, vector<8x128xf32> -> vector<8x128xf32>
    %19 = arith.addf %16, %18 : vector<8x128xf32>
    %c0_12 = arith.constant 0 : index
    %c0_13 = arith.constant 0 : index
    %20 = vector.load %arg8[%c0_12, %c0_13] : memref<8x128xf32, #tpu.memory_space<vmem>>, vector<8x128xf32>
    tpu.vector_store %arg8[%c0_12, %c0_13], %19 {strides = array<i32>} : memref<8x128xf32, #tpu.memory_space<vmem>>, vector<8x128xf32>,
    %c0_i32_14 = arith.constant 0 : i32
    %21 = arith.cmpi eq, %arg1, %c0_i32_14 : i32
    %22 = arith.extui %21 : i1 to i32
    %c0_i32_15 = arith.constant 0 : i32
    %23 = arith.cmpi ne, %22, %c0_i32_15 : i32
    scf.if %23 {
      %c0_16 = arith.constant 0 : index
      %c0_17 = arith.constant 0 : index
      %24 = vector.load %arg8[%c0_16, %c0_17] : memref<8x128xf32, #tpu.memory_space<vmem>>, vector<8x128xf32>
      %c0_18 = arith.constant 0 : index
      %c0_19 = arith.constant 0 : index
      %25 = vector.load %arg6[%c0_18, %c0_19] : memref<1x128xf32, #tpu.memory_space<vmem>>, vector<1x128xf32>
      %26 = vector.broadcast %25 : vector<1x128xf32> to vector<8x128xf32>
      %27 = arith.addf %24, %26 : vector<8x128xf32>
      %c0_20 = arith.constant 0 : index
      %c0_21 = arith.constant 0 : index
      %28 = vector.load %arg7[%c0_20, %c0_21] : memref<8x128xf32, #tpu.memory_space<vmem>>, vector<8x128xf32>
      tpu.vector_store %arg7[%c0_20, %c0_21], %27 {strides = array<i32>} : memref<8x128xf32, #tpu.memory_space<vmem>>, vector<8x128xf32>,
    } else {
    }
    return
  }
  func.func @transform_0(%arg0: i32, %arg1: i32) -> (i32, i32) {
    %c0_i32 = arith.constant 0 : i32
    %c0_i32_0 = arith.constant 0 : i32
    %c0_i32_1 = arith.constant 0 : i32
    return %c0_i32, %c0_i32_0 : i32, i32
  }
  func.func @transform_1(%arg0: i32, %arg1: i32) -> (i32, i32) {
    %c0_i32 = arith.constant 0 : i32
    %c0_i32_0 = arith.constant 0 : i32
    return %c0_i32, %arg1 : i32, i32
  }
  func.func @transform_2(%arg0: i32, %arg1: i32) -> (i32, i32) {
    %c0_i32 = arith.constant 0 : i32
    %c0_i32_0 = arith.constant 0 : i32
    return %c0_i32, %arg1 : i32, i32
  }
  func.func @transform_3(%arg0: i32, %arg1: i32) -> (i32, i32) {
    %c0_i32 = arith.constant 0 : i32
    return %arg1, %arg0 : i32, i32
  }
  func.func @transform_4(%arg0: i32, %arg1: i32) -> (i32, i32) {
    %c0_i32 = arith.constant 0 : i32
    %c0_i32_0 = arith.constant 0 : i32
    return %c0_i32, %arg0 : i32, i32
  }
  func.func @transform_5(%arg0: i32, %arg1: i32) -> (i32, i32) {
    %c0_i32 = arith.constant 0 : i32
    %c0_i32_0 = arith.constant 0 : i32
    return %c0_i32, %arg0 : i32, i32
  }
}

</mosaic_0001>

<llo_original>
// kernel: timestep_block.1
$region0: #{timestep_block.1}
  #allocation0 [shape = 'u32[]', space=smem, size = 0x4, offset = 0x4, fixed_abs, tag = 'smem constant byte address 0x4 - core index']
  #allocation1 [shape = 'u32[72,128]{1,0:T(1,128)}', space=vmem, size = 0x9000, scoped, tag = 'internal scratch']
  #allocation2 [shape = 'f32[8,128]{1,0:T(8,128)}', space=vmem, size = 0x1000, scoped, tag = 'scratch operand']
  %s0 = inlined_call_operand.vmem [shape: bf16[8,32], index: 0, kind: input, shape index: {}]
  %s1 = inlined_call_operand.vmem [shape: bf16[32,128], index: 1, kind: input, shape index: {}]
  %s2 = inlined_call_operand.vmem [shape: f32[1,128], index: 2, kind: input, shape index: {}]
  %s3 = inlined_call_operand.vmem [shape: bf16[128,128], index: 3, kind: input, shape index: {}]
  %s4 = inlined_call_operand.vmem [shape: f32[1,128], index: 4, kind: input, shape index: {}]
  %s5 = inlined_call_operand.hbm [shape: f32[8,128], index: 5, kind: output, shape index: {}]
  %s6 = sld [smem:[#allocation0]]
  $region38: #{timestep_block.1} parent=0
    _
  %s8 = ssub.s32 1, %s6
  %s9 = scalar_select 0, %s8, %s6
  $region1: #{timestep_block.1} parent=0
    #allocation3 [shape = 'u8[4096]{0}', space=vmem, size = 0x1000, scoped, tag = 'output window, operand 0, single buffered']
    #allocation4 [shape = 's32[1]{0}', space=sflag, size = 0x4, scoped, tag = 'scoped memory for timestep_block.1']
    %10 = vsyncpa [#allocation4], 0
    // Predicated region
    $region2: #{timestep_block.1} parent=1 // pred_check
      _
    $region3: #{timestep_block.1} parent=1 // pred_check_branch
      %12 = sbr.rel (0) target = $region5
    $region4: #{timestep_block.1} parent=1 // pred_region
      _
    $region5: #{timestep_block.1} parent=1 // pred_fallthru
      _
    // Predicated region
    $region6: #{timestep_block.1} parent=1 // pred_check
      _
    $region7: #{timestep_block.1} parent=1 // pred_check_branch
      %14 = sbr.rel (0) target = $region9
    $region8: #{timestep_block.1} parent=1 // pred_region
      _
    $region9: #{timestep_block.1} parent=1 // pred_fallthru
      _
    // Predicated region
    $region10: #{timestep_block.1} parent=1 // pred_check
      _
    $region11: #{timestep_block.1} parent=1 // pred_check_branch
      %16 = sbr.rel (0) target = $region13
    $region12: #{timestep_block.1} parent=1 // pred_region
      _
    $region13: #{timestep_block.1} parent=1 // pred_fallthru
      _
    // Predicated region
    $region14: #{timestep_block.1} parent=1 // pred_check
      _
    $region15: #{timestep_block.1} parent=1 // pred_check_branch
      %18 = sbr.rel (0) target = $region17
    $region16: #{timestep_block.1} parent=1 // pred_region
      _
    $region17: #{timestep_block.1} parent=1 // pred_fallthru
      _
    // Predicated region
    $region18: #{timestep_block.1} parent=1 // pred_check
      _
    $region19: #{timestep_block.1} parent=1 // pred_check_branch
      %20 = sbr.rel (0) target = $region21
    $region20: #{timestep_block.1} parent=1 // pred_region
      _
    $region21: #{timestep_block.1} parent=1 // pred_fallthru
      _
    %p22 = scmp.eq.s32.totalorder 0, 0
    // Predicated region
    $region22: #{timestep_block.1} parent=1 // pred_check
      %p23 = pneg %p22
    $region23: #{timestep_block.1} parent=1 // pred_check_branch
      %25 = sbr.rel (%p23) target = $region25
    $region24: #{timestep_block.1} parent=1 // pred_region
      %26 = vst [vmem:[#allocation2] sm:$0xff] 0.0
    $region25: #{timestep_block.1} parent=1 // pred_fallthru
      _
    %v27 = vld [vmem:[%s0] sm:$0xf]
    %v28 = vld [vmem:[%s1] sm:$0xf]
    %v29 = vld [vmem:[%s1 + $0x4] sm:$0xf]
    %v30 = vld [vmem:[%s1 + $0x8] sm:$0xf]
    %v31 = vld [vmem:[%s1 + $0xc] sm:$0xf]
    %v32 = vld [vmem:[%s2] sm:$0x1]
    %v34 = vperm.slane %v32, 0
    %v40 = vunpack.c.l.b16 %v28
    %v41 = vunpack.c.l.b16 %v29
    %v42 = vunpack.c.l.b16 %v30
    %v43 = vunpack.c.l.b16 %v31
    %v44 = vpack.c.b16 %v41, %v40
    %v45 = vpack.c.b16 %v43, %v42
    %vm48 = vcmask 261120
    %v50 = vsel %vm48, %v27, 0
    %52 = vmatpush.bf16.msra.mxu0 0
    %53 = vmatpush.bf16.msra.mxu0 0
    %54 = vmatpush.bf16.msra.mxu0 0
    %55 = vmatpush.bf16.msra.mxu0 0
    %56 = vmatpush.bf16.msra.mxu0 0
    %57 = vmatpush.bf16.msra.mxu0 0
    %58 = vmatpush.bf16.msra.mxu0 %v45
    %59 = vmatpush.bf16.msra.mxu0 %v44
    %60 = vmatmul.bf16.gmra.mxu0 %v50
    %v61 = vpop.f32.mrf.mxu0
    %v62 = vadd.f32 %v34, %v61
    %v63 = vpop.f32.mrf.mxu0
    %64 = vdwg.mxu0
    %v65 = vxor.u32 %v62, 2147483648
    %v66 = vmul.f32 %v65, 1.442695
    %v67 = vpow.pop %v66
    %v68 = vadd.f32 %v67, 1.0
    %v69 = vrcp.pop %v68
    %v70 = vmul.f32 %v68, %v69
    %v71 = vsub.f32 1.0, %v70
    %v72 = vmul.f32 %v69, %v71
    %v73 = vadd.f32 %v69, %v72
    %vm74 = vweird.f32 %v68
    %vm75 = vweird.f32 %v69
    %vm76 = vmor %vm74, %vm75
    %v77 = vsel %vm76, %v69, %v73
    %v78 = vand.u32 2147483647, %v68
    %vm79 = vcmp.eq.f32.partialorder %v78, 8.507059e+37
    %v80 = vand.u32 %v68, 2147483648
    %v81 = vor.u32 1.1754944e-38, %v80
    %v82 = vsel %vm79, %v81, %v77
    %v83 = vmul.f32 1.0, %v82
    %v84 = vmul.f32 %v62, %v83
    %v85 = vpack.c.bf16 %v84, %v84
    %v86 = vld [vmem:[#allocation2] sm:$0xff]
    %v87 = vld [vmem:[%s3] sm:$0xf]
    %v88 = vld [vmem:[%s3 + $0x4] sm:$0xf]
    %v89 = vld [vmem:[%s3 + $0x8] sm:$0xf]
    %v90 = vld [vmem:[%s3 + $0xc] sm:$0xf]
    %v91 = vld [vmem:[%s3 + $0x10] sm:$0xf]
    %v92 = vld [vmem:[%s3 + $0x14] sm:$0xf]
    %v93 = vld [vmem:[%s3 + $0x18] sm:$0xf]
    %v94 = vld [vmem:[%s3 + $0x1c] sm:$0xf]
    %v95 = vld [vmem:[%s3 + $0x20] sm:$0xf]
    %v96 = vld [vmem:[%s3 + $0x24] sm:$0xf]
    %v97 = vld [vmem:[%s3 + $0x28] sm:$0xf]
    %v98 = vld [vmem:[%s3 + $0x2c] sm:$0xf]
    %v99 = vld [vmem:[%s3 + $0x30] sm:$0xf]
    %v100 = vld [vmem:[%s3 + $0x34] sm:$0xf]
    %v101 = vld [vmem:[%s3 + $0x38] sm:$0xf]
    %v102 = vld [vmem:[%s3 + $0x3c] sm:$0xf]
    %v119 = vunpack.c.l.b16 %v87
    %v120 = vunpack.c.l.b16 %v88
    %v121 = vunpack.c.l.b16 %v89
    %v122 = vunpack.c.l.b16 %v90
    %v123 = vunpack.c.l.b16 %v91
    %v124 = vunpack.c.l.b16 %v92
    %v125 = vunpack.c.l.b16 %v93
    %v126 = vunpack.c.l.b16 %v94
    %v127 = vunpack.c.l.b16 %v95
    %v128 = vunpack.c.l.b16 %v96
    %v129 = vunpack.c.l.b16 %v97
    %v130 = vunpack.c.l.b16 %v98
    %v131 = vunpack.c.l.b16 %v99
    %v132 = vunpack.c.l.b16 %v100
    %v133 = vunpack.c.l.b16 %v101
    %v134 = vunpack.c.l.b16 %v102
    %v135 = vpack.c.b16 %v120, %v119
    %v136 = vpack.c.b16 %v122, %v121
    %v137 = vpack.c.b16 %v124, %v123
    %v138 = vpack.c.b16 %v126, %v125
    %v139 = vpack.c.b16 %v128, %v127
    %v140 = vpack.c.b16 %v130, %v129
    %v141 = vpack.c.b16 %v132, %v131
    %v142 = vpack.c.b16 %v134, %v133
    %151 = vmatpush.bf16.msra.mxu0 %v142
    %152 = vmatpush.bf16.msra.mxu0 %v141
    %153 = vmatpush.bf16.msra.mxu0 %v140
    %154 = vmatpush.bf16.msra.mxu0 %v139
    %155 = vmatpush.bf16.msra.mxu0 %v138
    %156 = vmatpush.bf16.msra.mxu0 %v137
    %157 = vmatpush.bf16.msra.mxu0 %v136
    %158 = vmatpush.bf16.msra.mxu0 %v135
    %159 = vmatmul.bf16.gmra.mxu0 %v85
    %v160 = vpop.f32.mrf.mxu0
    %v161 = vadd.f32 0.0, %v160
    %v162 = vpop.f32.mrf.mxu0
    %163 = vdwg.mxu0
    %v164 = vadd.f32 %v86, %v161
    %165 = vst [vmem:[#allocation2] sm:$0xff] %v164
    // Predicated region
    $region26: #{timestep_block.1} parent=1 // pred_check
      %p166 = pneg %p22
    $region27: #{timestep_block.1} parent=1 // pred_check_branch
      %168 = sbr.rel (%p166) target = $region29
    $region28: #{timestep_block.1} parent=1 // pred_region
      %v169 = vld [vmem:[#allocation2] sm:$0xff]
      %v170 = vld [vmem:[%s4] sm:$0x1]
      %v172 = vperm.slane %v170, 0
      %v174 = vadd.f32 %v169, %v172
      %175 = vst [vmem:[#allocation3] sm:$0xff] %v174
    $region29: #{timestep_block.1} parent=1 // pred_fallthru
      _
    // Predicated region
    $region30: #{timestep_block.1} parent=1 // pred_check
      _
    $region31: #{timestep_block.1} parent=1 // pred_check_branch
      %177 = sbr.rel (0) target = $region33
    $region32: #{timestep_block.1} parent=1 // pred_region
      %179 = vsyncadd [#allocation4], 0
      %s181 = sshll.u32 [#allocation3], 4
      %s182 = int_to_ptr.vmem [resolvable:$true] %s181
      %s183 = sshll.u32 %s5, 4
      %s184 = int_to_ptr.hbm [resolvable:$true] %s183
      %186 = dma.vmem_to_hbm [thread:$0]  %s182, 128, %s184, [#allocation4]
    $region33: #{timestep_block.1} parent=1 // pred_fallthru
      _
    // Predicated region
    $region34: #{timestep_block.1} parent=1 // pred_check
      _
    $region35: #{timestep_block.1} parent=1 // pred_check_branch
      %188 = sbr.rel (0) target = $region37
    $region36: #{timestep_block.1} parent=1 // pred_region
      %190 = dma.done [#allocation4], 128
    $region37: #{timestep_block.1} parent=1 // pred_fallthru
      _
    %191 = vsyncpa [#allocation4], 1

</llo_original>
